<compile_context>
chip_gen: v6e
topology: v6e:2x2x1
jax: 0.10.0
libtpu: 0.0.40
codegen_flags: <defaults>
</compile_context>

<pallas_src>
import functools

import jax
import jax.numpy as jnp
from jax.experimental import pallas as pl
from jax.experimental.pallas import tpu as pltpu

_EPS = 1e-8


def _lba_loss_kernel(lmbda, a_ref, b_ref, labc_ref, labr_ref, tst_ref, sts_ref):
    """Fused TST + STS Semisup_Loss.

    a_ref:    (N, D) text embeddings (native dtype, e.g. bf16)
    b_ref:    (M, D) shape embeddings
    labc_ref: (N, 1) int32 caption labels (column)
    labr_ref: (1, N) int32 caption labels (row)
    tst_ref:  (1, 1) f32 TST total loss
    sts_ref:  (1, 1) f32 STS total loss
    """
    N = a_ref.shape[0]
    M = b_ref.shape[0]

    A = a_ref[...]
    B = b_ref[...]

    # Gram matrix on the MXU at the input dtype, f32 accumulation.  (N, M)
    Mm = jax.lax.dot_general(
        A, B, (((1,), (1,)), ((), ())), preferred_element_type=jnp.float32
    )

    # ---- row softmax over shapes (axis=1): P_TS = softmax(Mm, 1) ------------
    row_max = jnp.max(Mm, axis=1, keepdims=True)                       # (N, 1)
    e_row = jnp.exp(Mm - row_max)                                      # (N, M) only full-size exp pass
    row_sum = jnp.sum(e_row, axis=1, keepdims=True)                    # (N, 1)
    P_TS = e_row * pl.reciprocal(row_sum, approx=True)                 # (N, M)

    # ---- column softmax derived from the same exponentials ------------------
    # softmax(Mm, 0)[i,k] = e_row[i,k]*w[i] / sum_j e_row[j,k]*w[j],
    # w[i] = exp(row_max[i] - global_max)  -> only N extra exps.
    # (Assumes score spread < ~80 so globally-stabilised exps don't flush
    #  whole columns to zero; guarded by the maximum() clamp below.)
    g = jnp.max(row_max, axis=0, keepdims=True)                        # (1, 1)
    w = jnp.exp(row_max - g)                                           # (N, 1)
    ew = e_row * w                                                     # (N, M)
    col_den = jnp.maximum(jnp.sum(ew, axis=0, keepdims=True), 1e-30)   # (1, M)
    S_col = ew * pl.reciprocal(col_den, approx=True)                   # (N, M) == P_ST^T

    # ---- round-trip walk matrices (shared by both branches) -----------------
    # P_TST = P_TS @ P_ST   (N, N)
    P_TST = jax.lax.dot_general(
        P_TS, S_col, (((1,), (1,)), ((), ())), preferred_element_type=jnp.float32
    )
    # P_STS = P_ST @ P_TS   (M, M)
    P_STS = jax.lax.dot_general(
        S_col, P_TS, (((0,), (0,)), ((), ())), preferred_element_type=jnp.float32
    )

    # ---- TST walker loss: soft-CE(P_TST, p_target) --------------------------
    # softmax(log(x+eps), 1) == (x+eps)/rowsum(x+eps): one (N,N) log, no exp.
    eq = (labc_ref[...] == labr_ref[...]).astype(jnp.float32)          # (N, N)
    p_target = eq * pl.reciprocal(jnp.sum(eq, axis=1, keepdims=True), approx=True)
    Pb = P_TST + _EPS
    log_rsum_T = jnp.log(jnp.sum(Pb, axis=1, keepdims=True))           # (N, 1)
    L_r_tst = jnp.mean(
        jnp.sum(p_target * (log_rsum_T - jnp.log(Pb)), axis=1, keepdims=True),
        axis=0, keepdims=True)                                         # (1, 1)

    # ---- TST visit loss vs uniform target over shapes ------------------------
    Pv_T = jnp.mean(P_TS, axis=0, keepdims=True) + _EPS                # (1, M)
    L_h_tst = (jnp.log(jnp.sum(Pv_T, axis=1, keepdims=True))
               - jnp.mean(jnp.log(Pv_T), axis=1, keepdims=True))       # (1, 1)

    tst_ref[...] = L_r_tst + lmbda * L_h_tst

    # ---- STS walker loss: target is the identity (labels = arange(M)) -------
    # soft-CE reduces to mean_i[ log(rowsum_i) - log(P_STS[i,i]+eps) ]:
    # only diagonal + rowsums needed, no (M, M) log pass.
    eye = (jax.lax.broadcasted_iota(jnp.int32, (M, M), 0)
           == jax.lax.broadcasted_iota(jnp.int32, (M, M), 1)).astype(jnp.float32)
    diag = jnp.sum(P_STS * eye, axis=1, keepdims=True)                 # (M, 1)
    rsum_S = jnp.sum(P_STS, axis=1, keepdims=True) + float(M) * _EPS   # (M, 1)
    L_r_sts = jnp.mean(jnp.log(rsum_S) - jnp.log(diag + _EPS),
                       axis=0, keepdims=True)                          # (1, 1)

    # ---- STS visit loss vs uniform target over texts --------------------------
    # P'_visit = mean over rows of P_ST = mean over axis=1 of S_col (kept as a column).
    Pv_S = jnp.mean(S_col, axis=1, keepdims=True) + _EPS               # (N, 1)
    L_h_sts = (jnp.log(jnp.sum(Pv_S, axis=0, keepdims=True))
               - jnp.mean(jnp.log(Pv_S), axis=0, keepdims=True))       # (1, 1)

    sts_ref[...] = L_r_sts + lmbda * L_h_sts


def lba_loss(text_embedding, shape_embedding, labels, lmbda=1.0):
    """LBA_Loss.forward(text_embedding, shape_embedding, labels) -> (TST, STS)."""
    N, D = text_embedding.shape
    M, D2 = shape_embedding.shape
    assert D == D2

    lab = labels.astype(jnp.int32)
    lab_col = lab.reshape(N, 1)
    lab_row = lab.reshape(1, N)

    # Single full-array block: size the scoped-VMEM limit to the working set.
    itemsize = jnp.dtype(text_embedding.dtype).itemsize
    est = 2 * itemsize * (N + M) * D                       # double-buffered embedding blocks
    est += 4 * (6 * N * M + 3 * N * N + 3 * M * M)         # f32 intermediates
    est += 4 * (64 * (N + M) + 4096)                       # small vectors / slack
    vmem_limit = int(min(max(2 * est, 16 * 1024 * 1024), 64 * 1024 * 1024))

    kernel = functools.partial(_lba_loss_kernel, float(lmbda))
    tst, sts = pl.pallas_call(
        kernel,
        out_shape=(jax.ShapeDtypeStruct((1, 1), jnp.float32),
                   jax.ShapeDtypeStruct((1, 1), jnp.float32)),
        in_specs=[
            pl.BlockSpec((N, D), lambda: (0, 0)),
            pl.BlockSpec((M, D), lambda: (0, 0)),
            pl.BlockSpec((N, 1), lambda: (0, 0)),
            pl.BlockSpec((1, N), lambda: (0, 0)),
        ],
        out_specs=(pl.BlockSpec((1, 1), lambda: (0, 0)),
                   pl.BlockSpec((1, 1), lambda: (0, 0))),
        compiler_params=pltpu.CompilerParams(vmem_limit_bytes=vmem_limit),
    )(text_embedding, shape_embedding, lab_col, lab_row)
    return tst[0, 0], sts[0, 0]


# ---------- pure-JAX reference (faithful translation of the PyTorch module) ----------
def _semisup_ref(A, B, labels, lmbda):
    eq = (labels[:, None] == labels[None, :]).astype(jnp.float32)
    p_target = eq / eq.sum(axis=1, keepdims=True)
    Mm = A @ B.T
    P_TS = jax.nn.softmax(Mm, axis=1)
    P_ST = jax.nn.softmax(Mm.T, axis=1)
    P_TST = P_TS @ P_ST

    def sce(inp, tgt):
        x = jnp.log(inp + 1e-8)
        x = jax.nn.softmax(x, axis=1)
        return jnp.mean(jnp.sum(-tgt * jnp.log(x), axis=1))

    L_r = sce(P_TST, p_target)
    P_visit = jnp.mean(P_TS, axis=0, keepdims=True)
    tgt2 = jnp.ones((1, P_visit.shape[1]), jnp.float32) / P_visit.shape[1]
    L_h = sce(P_visit, tgt2)
    return L_r + lmbda * L_h


def _lba_ref(text_embedding, shape_embedding, labels, lmbda=1.0):
    tst = _semisup_ref(text_embedding, shape_embedding, labels.astype(jnp.int32), lmbda)
    sts = _semisup_ref(
        shape_embedding,
        text_embedding,
        jnp.arange(shape_embedding.shape[0], dtype=jnp.int32),
        lmbda,
    )
    return tst, sts


if __name__ == "__main__":
    key = jax.random.PRNGKey(0)
    k1, k2 = jax.random.split(key)

    N_TEXT, N_SHAPE, EMB = 16, 8, 128     # 2 captions per shape
    text_embedding = jax.random.normal(k1, (N_TEXT, EMB), dtype=jnp.float32).astype(jnp.bfloat16)
    shape_embedding = jax.random.normal(k2, (N_SHAPE, EMB), dtype=jnp.float32).astype(jnp.bfloat16)
    labels = jnp.repeat(jnp.arange(N_SHAPE, dtype=jnp.int32), 2)  # (16,)

    lba = jax.jit(lba_loss, static_argnames=("lmbda",))
    tst_loss, sts_loss = lba(text_embedding, shape_embedding, labels, lmbda=1.0)
    jax.block_until_ready((tst_loss, sts_loss))

    tst_ref, sts_ref = _lba_ref(
        text_embedding.astype(jnp.float32),
        shape_embedding.astype(jnp.float32),
        labels,
        lmbda=1.0,
    )
    # approx reciprocals + bf16 MXU inputs -> allow a little drift vs the f32 reference
    assert jnp.allclose(tst_loss, tst_ref, rtol=2e-2, atol=2e-2), (tst_loss, tst_ref)
    assert jnp.allclose(sts_loss, sts_ref, rtol=2e-2, atol=2e-2), (sts_loss, sts_ref)

    print("KERNEL_OK")
</pallas_src>

<mosaic_0001>
module attributes {stable_mosaic.version = 11 : i64} {
  func.func @_lba_loss_kernel(%arg0: memref<16x128xbf16, #tpu.memory_space<vmem>>, %arg1: memref<8x128xbf16, #tpu.memory_space<vmem>>, %arg2: memref<16x1xi32, #tpu.memory_space<vmem>>, %arg3: memref<1x16xi32, #tpu.memory_space<vmem>>, %arg4: memref<1x1xf32, #tpu.memory_space<vmem>>, %arg5: memref<1x1xf32, #tpu.memory_space<vmem>>) attributes {dimension_semantics = [], scalar_prefetch = 0 : i64, scratch_operands = 0 : i64, tpu.core_type = #tpu.core_type<tc>} {
    %c0 = arith.constant 0 : index
    %c0_0 = arith.constant 0 : index
    %0 = vector.load %arg0[%c0, %c0_0] : memref<16x128xbf16, #tpu.memory_space<vmem>>, vector<16x128xbf16>
    %c0_1 = arith.constant 0 : index
    %c0_2 = arith.constant 0 : index
    %1 = vector.load %arg1[%c0_1, %c0_2] : memref<8x128xbf16, #tpu.memory_space<vmem>>, vector<8x128xbf16>
    %cst = arith.constant dense<0.000000e+00> : vector<16x8xf32>
    %2 = tpu.matmul %0, %1, %cst {dimension_numbers = #tpu.dot_dimension_numbers<[1], [1], [0], [0], [0, 0, 1, 0], [], []>} : vector<16x128xbf16>, vector<8x128xbf16>, vector<16x8xf32> -> vector<16x8xf32>
    %cst_3 = arith.constant dense<0xFF800000> : vector<16xf32>
    %3 = vector.multi_reduction <maximumf>, %2, %cst_3 [1] : vector<16x8xf32> to vector<16xf32>
    %4 = vector.shape_cast %3 : vector<16xf32> to vector<16x1xf32>
    %5 = vector.broadcast %4 : vector<16x1xf32> to vector<16x8xf32>
    %6 = arith.subf %2, %5 : vector<16x8xf32>
    %7 = math.exp %6 : vector<16x8xf32>
    %cst_4 = arith.constant dense<0.000000e+00> : vector<16xf32>
    %8 = vector.multi_reduction <add>, %7, %cst_4 [1] : vector<16x8xf32> to vector<16xf32>
    %9 = vector.shape_cast %8 : vector<16xf32> to vector<16x1xf32>
    %10 = tpu.reciprocal %9 {approx = true} : vector<16x1xf32> -> vector<16x1xf32>
    %11 = vector.broadcast %10 : vector<16x1xf32> to vector<16x8xf32>
    %12 = arith.mulf %7, %11 : vector<16x8xf32>
    %cst_5 = arith.constant dense<0xFF800000> : vector<1xf32>
    %13 = vector.multi_reduction <maximumf>, %4, %cst_5 [0] : vector<16x1xf32> to vector<1xf32>
    %14 = vector.shape_cast %13 : vector<1xf32> to vector<1x1xf32>
    %15 = vector.broadcast %14 : vector<1x1xf32> to vector<16x1xf32>
    %16 = arith.subf %4, %15 : vector<16x1xf32>
    %17 = math.exp %16 : vector<16x1xf32>
    %18 = vector.broadcast %17 : vector<16x1xf32> to vector<16x8xf32>
    %19 = arith.mulf %7, %18 : vector<16x8xf32>
    %cst_6 = arith.constant dense<0.000000e+00> : vector<8xf32>
    %20 = vector.multi_reduction <add>, %19, %cst_6 [0] : vector<16x8xf32> to vector<8xf32>
    %21 = vector.shape_cast %20 : vector<8xf32> to vector<1x8xf32>
    %cst_7 = arith.constant 1.000000e-30 : f32
    %22 = vector.broadcast %cst_7 : f32 to vector<1x8xf32>
    %23 = arith.maximumf %21, %22 : vector<1x8xf32>
    %24 = tpu.reciprocal %23 {approx = true} : vector<1x8xf32> -> vector<1x8xf32>
    %25 = vector.broadcast %24 : vector<1x8xf32> to vector<16x8xf32>
    %26 = arith.mulf %19, %25 : vector<16x8xf32>
    %cst_8 = arith.constant dense<0.000000e+00> : vector<16x16xf32>
    %27 = tpu.matmul %12, %26, %cst_8 {dimension_numbers = #tpu.dot_dimension_numbers<[1], [1], [0], [0], [0, 0, 1, 0], [], []>} : vector<16x8xf32>, vector<16x8xf32>, vector<16x16xf32> -> vector<16x16xf32>
    %cst_9 = arith.constant dense<0.000000e+00> : vector<8x8xf32>
    %28 = tpu.matmul %26, %12, %cst_9 {dimension_numbers = #tpu.dot_dimension_numbers<[0], [0], [1], [1], [0, 1, 1, 1], [], []>} : vector<16x8xf32>, vector<16x8xf32>, vector<8x8xf32> -> vector<8x8xf32>
    %c0_10 = arith.constant 0 : index
    %c0_11 = arith.constant 0 : index
    %29 = vector.load %arg2[%c0_10, %c0_11] : memref<16x1xi32, #tpu.memory_space<vmem>>, vector<16x1xi32>
    %c0_12 = arith.constant 0 : index
    %c0_13 = arith.constant 0 : index
    %30 = vector.load %arg3[%c0_12, %c0_13] : memref<1x16xi32, #tpu.memory_space<vmem>>, vector<1x16xi32>
    %31 = vector.broadcast %29 : vector<16x1xi32> to vector<16x16xi32>
    %32 = vector.broadcast %30 : vector<1x16xi32> to vector<16x16xi32>
    %33 = arith.cmpi eq, %31, %32 : vector<16x16xi32>
    %34 = arith.extui %33 : vector<16x16xi1> to vector<16x16xi32>
    %35 = arith.sitofp %34 : vector<16x16xi32> to vector<16x16xf32>
    %cst_14 = arith.constant dense<0.000000e+00> : vector<16xf32>
    %36 = vector.multi_reduction <add>, %35, %cst_14 [1] : vector<16x16xf32> to vector<16xf32>
    %37 = vector.shape_cast %36 : vector<16xf32> to vector<16x1xf32>
    %38 = tpu.reciprocal %37 {approx = true} : vector<16x1xf32> -> vector<16x1xf32>
    %39 = vector.broadcast %38 : vector<16x1xf32> to vector<16x16xf32>
    %40 = arith.mulf %35, %39 : vector<16x16xf32>
    %cst_15 = arith.constant 9.99999993E-9 : f32
    %41 = vector.broadcast %cst_15 : f32 to vector<16x16xf32>
    %42 = arith.addf %27, %41 : vector<16x16xf32>
    %cst_16 = arith.constant dense<0.000000e+00> : vector<16xf32>
    %43 = vector.multi_reduction <add>, %42, %cst_16 [1] : vector<16x16xf32> to vector<16xf32>
    %44 = vector.shape_cast %43 : vector<16xf32> to vector<16x1xf32>
    %45 = math.log %44 : vector<16x1xf32>
    %46 = math.log %42 : vector<16x16xf32>
    %47 = vector.broadcast %45 : vector<16x1xf32> to vector<16x16xf32>
    %48 = arith.subf %47, %46 : vector<16x16xf32>
    %49 = arith.mulf %40, %48 : vector<16x16xf32>
    %cst_17 = arith.constant dense<0.000000e+00> : vector<16xf32>
    %50 = vector.multi_reduction <add>, %49, %cst_17 [1] : vector<16x16xf32> to vector<16xf32>
    %51 = vector.shape_cast %50 : vector<16xf32> to vector<16x1xf32>
    %cst_18 = arith.constant dense<0.000000e+00> : vector<1xf32>
    %52 = vector.multi_reduction <add>, %51, %cst_18 [0] : vector<16x1xf32> to vector<1xf32>
    %53 = vector.shape_cast %52 : vector<1xf32> to vector<1x1xf32>
    %cst_19 = arith.constant 1.600000e+01 : f32
    %54 = vector.broadcast %cst_19 : f32 to vector<1x1xf32>
    %55 = arith.divf %53, %54 : vector<1x1xf32>
    %cst_20 = arith.constant dense<0.000000e+00> : vector<8xf32>
    %56 = vector.multi_reduction <add>, %12, %cst_20 [0] : vector<16x8xf32> to vector<8xf32>
    %57 = vector.shape_cast %56 : vector<8xf32> to vector<1x8xf32>
    %cst_21 = arith.constant 1.600000e+01 : f32
    %58 = vector.broadcast %cst_21 : f32 to vector<1x8xf32>
    %59 = arith.divf %57, %58 : vector<1x8xf32>
    %cst_22 = arith.constant 9.99999993E-9 : f32
    %60 = vector.broadcast %cst_22 : f32 to vector<1x8xf32>
    %61 = arith.addf %59, %60 : vector<1x8xf32>
    %cst_23 = arith.constant dense<0.000000e+00> : vector<1xf32>
    %62 = vector.multi_reduction <add>, %61, %cst_23 [1] : vector<1x8xf32> to vector<1xf32>
    %63 = vector.shape_cast %62 : vector<1xf32> to vector<1x1xf32>
    %64 = math.log %63 : vector<1x1xf32>
    %65 = math.log %61 : vector<1x8xf32>
    %cst_24 = arith.constant dense<0.000000e+00> : vector<1xf32>
    %66 = vector.multi_reduction <add>, %65, %cst_24 [1] : vector<1x8xf32> to vector<1xf32>
    %67 = vector.shape_cast %66 : vector<1xf32> to vector<1x1xf32>
    %cst_25 = arith.constant 8.000000e+00 : f32
    %68 = vector.broadcast %cst_25 : f32 to vector<1x1xf32>
    %69 = arith.divf %67, %68 : vector<1x1xf32>
    %70 = arith.subf %64, %69 : vector<1x1xf32>
    %cst_26 = arith.constant 1.000000e+00 : f32
    %71 = vector.broadcast %cst_26 : f32 to vector<1x1xf32>
    %72 = arith.mulf %71, %70 : vector<1x1xf32>
    %73 = arith.addf %55, %72 : vector<1x1xf32>
    %c0_27 = arith.constant 0 : index
    %c0_28 = arith.constant 0 : index
    %74 = vector.load %arg4[%c0_27, %c0_28] : memref<1x1xf32, #tpu.memory_space<vmem>>, vector<1x1xf32>
    tpu.vector_store %arg4[%c0_27, %c0_28], %73 {strides = array<i32>} : memref<1x1xf32, #tpu.memory_space<vmem>>, vector<1x1xf32>,
    %75 = tpu.iota {dimensions = array<i32: 0>} : vector<8x8xi32>
    %76 = tpu.iota {dimensions = array<i32: 1>} : vector<8x8xi32>
    %77 = arith.cmpi eq, %75, %76 : vector<8x8xi32>
    %78 = arith.extui %77 : vector<8x8xi1> to vector<8x8xi32>
    %79 = arith.sitofp %78 : vector<8x8xi32> to vector<8x8xf32>
    %80 = arith.mulf %28, %79 : vector<8x8xf32>
    %cst_29 = arith.constant dense<0.000000e+00> : vector<8xf32>
    %81 = vector.multi_reduction <add>, %80, %cst_29 [1] : vector<8x8xf32> to vector<8xf32>
    %82 = vector.shape_cast %81 : vector<8xf32> to vector<8x1xf32>
    %cst_30 = arith.constant dense<0.000000e+00> : vector<8xf32>
    %83 = vector.multi_reduction <add>, %28, %cst_30 [1] : vector<8x8xf32> to vector<8xf32>
    %84 = vector.shape_cast %83 : vector<8xf32> to vector<8x1xf32>
    %cst_31 = arith.constant 7.99999995E-8 : f32
    %85 = vector.broadcast %cst_31 : f32 to vector<8x1xf32>
    %86 = arith.addf %84, %85 : vector<8x1xf32>
    %87 = math.log %86 : vector<8x1xf32>
    %cst_32 = arith.constant 9.99999993E-9 : f32
    %88 = vector.broadcast %cst_32 : f32 to vector<8x1xf32>
    %89 = arith.addf %82, %88 : vector<8x1xf32>
    %90 = math.log %89 : vector<8x1xf32>
    %91 = arith.subf %87, %90 : vector<8x1xf32>
    %cst_33 = arith.constant dense<0.000000e+00> : vector<1xf32>
    %92 = vector.multi_reduction <add>, %91, %cst_33 [0] : vector<8x1xf32> to vector<1xf32>
    %93 = vector.shape_cast %92 : vector<1xf32> to vector<1x1xf32>
    %cst_34 = arith.constant 8.000000e+00 : f32
    %94 = vector.broadcast %cst_34 : f32 to vector<1x1xf32>
    %95 = arith.divf %93, %94 : vector<1x1xf32>
    %cst_35 = arith.constant dense<0.000000e+00> : vector<16xf32>
    %96 = vector.multi_reduction <add>, %26, %cst_35 [1] : vector<16x8xf32> to vector<16xf32>
    %97 = vector.shape_cast %96 : vector<16xf32> to vector<16x1xf32>
    %cst_36 = arith.constant 8.000000e+00 : f32
    %98 = vector.broadcast %cst_36 : f32 to vector<16x1xf32>
    %99 = arith.divf %97, %98 : vector<16x1xf32>
    %cst_37 = arith.constant 9.99999993E-9 : f32
    %100 = vector.broadcast %cst_37 : f32 to vector<16x1xf32>
    %101 = arith.addf %99, %100 : vector<16x1xf32>
    %cst_38 = arith.constant dense<0.000000e+00> : vector<1xf32>
    %102 = vector.multi_reduction <add>, %101, %cst_38 [0] : vector<16x1xf32> to vector<1xf32>
    %103 = vector.shape_cast %102 : vector<1xf32> to vector<1x1xf32>
    %104 = math.log %103 : vector<1x1xf32>
    %105 = math.log %101 : vector<16x1xf32>
    %cst_39 = arith.constant dense<0.000000e+00> : vector<1xf32>
    %106 = vector.multi_reduction <add>, %105, %cst_39 [0] : vector<16x1xf32> to vector<1xf32>
    %107 = vector.shape_cast %106 : vector<1xf32> to vector<1x1xf32>
    %cst_40 = arith.constant 1.600000e+01 : f32
    %108 = vector.broadcast %cst_40 : f32 to vector<1x1xf32>
    %109 = arith.divf %107, %108 : vector<1x1xf32>
    %110 = arith.subf %104, %109 : vector<1x1xf32>
    %cst_41 = arith.constant 1.000000e+00 : f32
    %111 = vector.broadcast %cst_41 : f32 to vector<1x1xf32>
    %112 = arith.mulf %111, %110 : vector<1x1xf32>
    %113 = arith.addf %95, %112 : vector<1x1xf32>
    %c0_42 = arith.constant 0 : index
    %c0_43 = arith.constant 0 : index
    %114 = vector.load %arg5[%c0_42, %c0_43] : memref<1x1xf32, #tpu.memory_space<vmem>>, vector<1x1xf32>
    tpu.vector_store %arg5[%c0_42, %c0_43], %113 {strides = array<i32>} : memref<1x1xf32, #tpu.memory_space<vmem>>, vector<1x1xf32>,
    return
  }
}

</mosaic_0001>

<llo_original>
// kernel: lba_loss.1
$region0: #{lba_loss.1}
  #allocation0 [shape = 'u32[]', space=smem, size = 0x4, offset = 0x4, fixed_abs, tag = 'smem constant byte address 0x4 - core index']
  #allocation1 [shape = 'u32[144,128]{1,0:T(1,128)}', space=vmem, size = 0x12000, scoped, tag = 'internal scratch']
  %s0 = inlined_call_operand.vmem [shape: bf16[16,128], index: 0, kind: input, shape index: {}]
  %s1 = inlined_call_operand.vmem [shape: bf16[8,128], index: 1, kind: input, shape index: {}]
  %s2 = inlined_call_operand.vmem [shape: s32[16,1], index: 2, kind: input, shape index: {}]
  %s3 = inlined_call_operand.vmem [shape: s32[1,16], index: 3, kind: input, shape index: {}]
  %s4 = inlined_call_operand.hbm [shape: f32[1,1], index: 4, kind: output, shape index: {0}]
  %s5 = inlined_call_operand.hbm [shape: f32[1,1], index: 5, kind: output, shape index: {1}]
  %6 = xla_tuple %s4, %s5
  %s7 = sld [smem:[#allocation0]]
  $region34: #{lba_loss.1} parent=0
    _
  %s9 = ssub.s32 1, %s7
  %s10 = scalar_select 0, %s9, %s7
  $region1: #{lba_loss.1} parent=0
    #allocation2 [shape = 'u8[512]{0}', space=vmem, size = 0x400, scoped, tag = 'output window, operand 0, single buffered']
    #allocation3 [shape = 's32[1]{0}', space=sflag, size = 0x4, scoped, tag = 'scoped memory for lba_loss.1']
    #allocation4 [shape = 'u8[512]{0}', space=vmem, size = 0x400, scoped, tag = 'output window, operand 1, single buffered']
    #allocation5 [shape = 's32[1]{0}', space=sflag, size = 0x4, scoped, tag = 'scoped memory for lba_loss.1']
    %11 = vsyncpa [#allocation3], 0
    %12 = vsyncpa [#allocation5], 0
    // Predicated region
    $region2: #{lba_loss.1} parent=1 // pred_check
      _
    $region3: #{lba_loss.1} parent=1 // pred_check_branch
      %14 = sbr.rel (0) target = $region5
    $region4: #{lba_loss.1} parent=1 // pred_region
      _
    $region5: #{lba_loss.1} parent=1 // pred_fallthru
      _
    // Predicated region
    $region6: #{lba_loss.1} parent=1 // pred_check
      _
    $region7: #{lba_loss.1} parent=1 // pred_check_branch
      %16 = sbr.rel (0) target = $region9
    $region8: #{lba_loss.1} parent=1 // pred_region
      _
    $region9: #{lba_loss.1} parent=1 // pred_fallthru
      _
    // Predicated region
    $region10: #{lba_loss.1} parent=1 // pred_check
      _
    $region11: #{lba_loss.1} parent=1 // pred_check_branch
      %18 = sbr.rel (0) target = $region13
    $region12: #{lba_loss.1} parent=1 // pred_region
      _
    $region13: #{lba_loss.1} parent=1 // pred_fallthru
      _
    // Predicated region
    $region14: #{lba_loss.1} parent=1 // pred_check
      _
    $region15: #{lba_loss.1} parent=1 // pred_check_branch
      %20 = sbr.rel (0) target = $region17
    $region16: #{lba_loss.1} parent=1 // pred_region
      _
    $region17: #{lba_loss.1} parent=1 // pred_fallthru
      _
    %v22 = vld [vmem:[%s0] sm:$0xf]
    %v23 = vld [vmem:[%s0 + $0x4] sm:$0xf]
    %v24 = vld [vmem:[%s1] sm:$0xf]
    %v27 = vunpack.c.l.b16 %v22
    %v28 = vunpack.c.l.b16 %v23
    %v29 = vpack.c.b16 %v28, %v27
    %31 = vmatprep.subr.bf16.mxu0 0
    %32 = vmatpush1.bf16.xpose.msra.mxu0 0
    %33 = vmatprep.subr.bf16.mxu0 0
    %34 = vmatpush1.bf16.xpose.msra.mxu0 0
    %35 = vmatprep.subr.bf16.mxu0 0
    %36 = vmatpush1.bf16.xpose.msra.mxu0 0
    %37 = vmatprep.subr.bf16.mxu0 0
    %38 = vmatpush1.bf16.xpose.msra.mxu0 0
    %39 = vmatprep.subr.bf16.mxu0 0
    %40 = vmatpush1.bf16.xpose.msra.mxu0 0
    %41 = vmatprep.subr.bf16.mxu0 0
    %42 = vmatpush1.bf16.xpose.msra.mxu0 0
    %43 = vmatprep.subr.bf16.mxu0 0
    %44 = vmatpush1.bf16.xpose.msra.mxu0 0
    %45 = vmatprep.subr.bf16.mxu0 0
    %46 = vmatpush1.bf16.xpose.msra.mxu0 %v24
    %47 = vmatprep.subr.bf16.mxu0 0
    %48 = vmatpush2.bf16.xpose.msra.mxu0 0
    %49 = vmatprep.subr.bf16.mxu0 0
    %50 = vmatpush2.bf16.xpose.msra.mxu0 0
    %51 = vmatprep.subr.bf16.mxu0 0
    %52 = vmatpush2.bf16.xpose.msra.mxu0 0
    %53 = vmatprep.subr.bf16.mxu0 0
    %54 = vmatpush2.bf16.xpose.msra.mxu0 0
    %55 = vmatprep.subr.bf16.mxu0 0
    %56 = vmatpush2.bf16.xpose.msra.mxu0 0
    %57 = vmatprep.subr.bf16.mxu0 0
    %58 = vmatpush2.bf16.xpose.msra.mxu0 0
    %59 = vmatprep.subr.bf16.mxu0 0
    %60 = vmatpush2.bf16.xpose.msra.mxu0 0
    %61 = vmatprep.subr.bf16.mxu0 0
    %62 = vmatpush2.bf16.xpose.msra.mxu0 0
    %63 = vmatprep.mubr.bf16.mxu0 0
    %64 = vmatmul.mubr.bf16.gmra.mxu0 %v29
    %v65 = vpop.f32.mrf.mxu0
    %v66 = vadd.f32 0.0, %v65
    %v67 = vpop.f32.mrf.mxu0
    %v68 = vpop.f32.mrf.mxu0
    %v69 = vadd.f32 0.0, %v68
    %v70 = vpop.f32.mrf.mxu0
    %71 = vdwg.mxu0
    %vm72 = vcmask 64512
    %v73 = vsel %vm72, %v66, -inf
    %74 = vmax.xlane.f32.xlu0 %v73
    %v75 = vpop.xlane.xlu0 %74
    %v76 = vsel %vm72, %v69, -inf
    %77 = vmax.xlane.f32.xlu0 %v76
    %v78 = vpop.xlane.xlu0 %77
    %v79 = vsub.f32 %v66, %v75
    %v80 = vsub.f32 %v69, %v78
    %v81 = vmul.f32 %v79, 1.442695
    %v82 = vpow.pop %v81
    %v83 = vmul.f32 %v80, 1.442695
    %v84 = vpow.pop %v83
    %v85 = vsel %vm72, %v82, 0.0
    %86 = vadd.xlane.f32.xlu0 %v85
    %v87 = vpop.xlane.xlu0 %86
    %v88 = vsel %vm72, %v84, 0.0
    %89 = vadd.xlane.f32.xlu0 %v88
    %v90 = vpop.xlane.xlu0 %89
    %v91 = vrcp.pop %v87
    %v92 = vrcp.pop %v90
    %v93 = vmul.f32 %v82, %v91
    %v94 = vmul.f32 %v84, %v92
    %v95 = vmax.f32 %v75, %v78
    %v96 = vrot.slane %v95, 4
    %v97 = vmax.f32 %v95, %v96
    %v98 = vrot.slane %v97, 2
    %v99 = vmax.f32 %v97, %v98
    %v100 = vrot.slane %v99, 1
    %v101 = vmax.f32 %v99, %v100
    %v102 = vsub.f32 %v75, %v101
    %v103 = vsub.f32 %v78, %v101
    %v104 = vmul.f32 %v102, 1.442695
    %v105 = vpow.pop %v104
    %v106 = vmul.f32 %v103, 1.442695
    %v107 = vpow.pop %v106
    %v108 = vmul.f32 %v82, %v105
    %v109 = vmul.f32 %v84, %v107
    %v110 = vsel %vm72, %v108, 0.0
    %v111 = vsel %vm72, %v109, 0.0
    %v112 = vadd.f32 %v110, %v111
    %v113 = vrot.slane %v112, 4
    %v114 = vadd.f32 %v112, %v113
    %v115 = vrot.slane %v114, 2
    %v116 = vadd.f32 %v114, %v115
    %v117 = vrot.slane %v116, 1
    %v118 = vadd.f32 %v116, %v117
    %v119 = vmax.f32 %v118, 1e-30
    %v120 = vrcp.pop %v119
    %v121 = vmul.f32 %v108, %v120
    %v122 = vmul.f32 %v109, %v120
    %123 = vxpose.xlu0.b32.start [1/16] %v121, 128
    %124 = vxpose.xlu0.b32.cont [2/16] %v122, 128
    %125 = vxpose.xlu0.b32.cont [3/16] 0.0, 128
    %126 = vxpose.xlu0.b32.cont [4/16] 0.0, 128
    %127 = vxpose.xlu0.b32.cont [5/16] 0.0, 128
    %128 = vxpose.xlu0.b32.cont [6/16] 0.0, 128
    %129 = vxpose.xlu0.b32.cont [7/16] 0.0, 128
    %130 = vxpose.xlu0.b32.cont [8/16] 0.0, 128
    %131 = vxpose.xlu0.b32.cont [9/16] 0.0, 128
    %132 = vxpose.xlu0.b32.cont [10/16] 0.0, 128
    %133 = vxpose.xlu0.b32.cont [11/16] 0.0, 128
    %134 = vxpose.xlu0.b32.cont [12/16] 0.0, 128
    %135 = vxpose.xlu0.b32.cont [13/16] 0.0, 128
    %136 = vxpose.xlu0.b32.cont [14/16] 0.0, 128
    %137 = vxpose.xlu0.b32.cont [15/16] 0.0, 128
    %138 = vxpose.xlu0.b32.end [16/16] 0.0, 128
    %v139 = vpop.trf.xlu0
    %v140 = vpop.trf.xlu0
    %v141 = vpop.trf.xlu0
    %v142 = vpop.trf.xlu0
    %v143 = vpop.trf.xlu0
    %v144 = vpop.trf.xlu0
    %v145 = vpop.trf.xlu0
    %v146 = vpop.trf.xlu0
    %v147 = vpop.trf.xlu0
    %v148 = vpop.trf.xlu0
    %v149 = vpop.trf.xlu0
    %v150 = vpop.trf.xlu0
    %v151 = vpop.trf.xlu0
    %v152 = vpop.trf.xlu0
    %v153 = vpop.trf.xlu0
    %v154 = vpop.trf.xlu0
    %vm155 = vcmask 130048
    %v157 = vsel %vm155, %v139, 0
    %159 = vmatprep.subr.mxu0 0.0
    %160 = vmatpush1.msra.mxu0 0.0
    %161 = vmatprep.subr.mxu0 0.0
    %162 = vmatpush1.msra.mxu0 0.0
    %163 = vmatprep.subr.mxu0 0.0
    %164 = vmatpush1.msra.mxu0 0.0
    %165 = vmatprep.subr.mxu0 0.0
    %166 = vmatpush1.msra.mxu0 0.0
    %167 = vmatprep.subr.mxu0 0.0
    %168 = vmatpush1.msra.mxu0 0.0
    %169 = vmatprep.subr.mxu0 0.0
    %170 = vmatpush1.msra.mxu0 0.0
    %171 = vmatprep.subr.mxu0 0.0
    %172 = vmatpush1.msra.mxu0 0.0
    %173 = vmatprep.subr.mxu0 0.0
    %174 = vmatpush1.msra.mxu0 0.0
    %175 = vmatprep.subr.mxu0 0.0
    %176 = vmatpush1.msra.mxu0 0.0
    %177 = vmatprep.subr.mxu0 0.0
    %178 = vmatpush1.msra.mxu0 0.0
    %179 = vmatprep.subr.mxu0 0.0
    %180 = vmatpush1.msra.mxu0 0.0
    %181 = vmatprep.subr.mxu0 0.0
    %182 = vmatpush1.msra.mxu0 0.0
    %183 = vmatprep.subr.mxu0 0.0
    %184 = vmatpush1.msra.mxu0 0.0
    %185 = vmatprep.subr.mxu0 0.0
    %186 = vmatpush1.msra.mxu0 0.0
    %187 = vmatprep.subr.mxu0 0.0
    %188 = vmatpush1.msra.mxu0 %v94
    %189 = vmatprep.subr.mxu0 0.0
    %190 = vmatpush1.msra.mxu0 %v93
    %191 = vmatprep.subr.mxu0 0.0
    %192 = vmatpush2.msra.mxu0 0.0
    %193 = vmatprep.subr.mxu0 0.0
    %194 = vmatpush2.msra.mxu0 0.0
    %195 = vmatprep.subr.mxu0 0.0
    %196 = vmatpush2.msra.mxu0 0.0
    %197 = vmatprep.subr.mxu0 0.0
    %198 = vmatpush2.msra.mxu0 0.0
    %199 = vmatprep.subr.mxu0 0.0
    %200 = vmatpush2.msra.mxu0 0.0
    %201 = vmatprep.subr.mxu0 0.0
    %202 = vmatpush2.msra.mxu0 0.0
    %203 = vmatprep.subr.mxu0 0.0
    %204 = vmatpush2.msra.mxu0 0.0
    %205 = vmatprep.subr.mxu0 0.0
    %206 = vmatpush2.msra.mxu0 0.0
    %207 = vmatprep.subr.mxu0 0.0
    %208 = vmatpush2.msra.mxu0 0.0
    %209 = vmatprep.subr.mxu0 0.0
    %210 = vmatpush2.msra.mxu0 0.0
    %211 = vmatprep.subr.mxu0 0.0
    %212 = vmatpush2.msra.mxu0 0.0
    %213 = vmatprep.subr.mxu0 0.0
    %214 = vmatpush2.msra.mxu0 0.0
    %215 = vmatprep.subr.mxu0 0.0
    %216 = vmatpush2.msra.mxu0 0.0
    %217 = vmatprep.subr.mxu0 0.0
    %218 = vmatpush2.msra.mxu0 0.0
    %219 = vmatprep.subr.mxu0 0.0
    %220 = vmatpush2.msra.mxu0 0.0
    %221 = vmatprep.subr.mxu0 0.0
    %222 = vmatpush2.msra.mxu0 0.0
    %223 = vmatprep.mubr.f32.mxu0 0.0
    %224 = vmatmul.mubr.f32.gmra.mxu0 %v157
    %v225 = vpop.f32.mrf.mxu0
    %v226 = vadd.f32 0.0, %v225
    %v227 = vpop.f32.mrf.mxu0
    %228 = vdwg.mxu0
    %v229 = vld [vmem:[%s2] sm:$0xff]
    %v230 = vld [vmem:[%s2 + $0x8] sm:$0xff]
    %v231 = vld [vmem:[%s3] sm:$0x1]
    %232 = vset.pattern.permute.xlu0 0
    %233 = vperm.xlu0 %232, %v229
    %v234 = vpop.permute.xlu0 %233
    %235 = vset.pattern.permute.xlu0 0
    %236 = vperm.xlu0 %235, %v230
    %v237 = vpop.permute.xlu0 %236
    %v238 = vlaneseq
    %v239 = vshrl.u32 %v238, 7
    %v240 = vsub.s32 0, %v239
    %v241 = vrot.slane %v231, %v240
    %vm242 = vcmp.eq.s32.totalorder %v234, %v241
    %vm243 = vcmp.eq.s32.totalorder %v237, %v241
    %v244 = vsel %vm242, 1, 0
    %v245 = vsel %vm243, 1, 0
    %v246 = vcvt.s32.f32 %v244
    %v247 = vcvt.s32.f32 %v245
    %v248 = vsel %vm155, %v246, 0.0
    %249 = vadd.xlane.f32.xlu0 %v248
    %v250 = vpop.xlane.xlu0 %249
    %v251 = vsel %vm155, %v247, 0.0
    %252 = vadd.xlane.f32.xlu0 %v251
    %v253 = vpop.xlane.xlu0 %252
    %v254 = vrcp.pop %v250
    %v255 = vrcp.pop %v253
    %v256 = vmul.f32 %v246, %v254
    %v257 = vmul.f32 %v247, %v255
    %v259 = vsel %vm72, %v93, 0
    %v262 = vsel %vm72, %v94, 0
    %v265 = vsel %vm72, %v121, 0
    %v268 = vsel %vm72, %v122, 0
    %270 = vmatprep.subr.mxu0 0.0
    %271 = vmatpush1.xpose.msra.mxu0 0.0
    %272 = vmatprep.subr.mxu0 0.0
    %273 = vmatpush1.xpose.msra.mxu0 0.0
    %274 = vmatprep.subr.mxu0 0.0
    %275 = vmatpush1.xpose.msra.mxu0 0.0
    %276 = vmatprep.subr.mxu0 0.0
    %277 = vmatpush1.xpose.msra.mxu0 0.0
    %278 = vmatprep.subr.mxu0 0.0
    %279 = vmatpush1.xpose.msra.mxu0 0.0
    %280 = vmatprep.subr.mxu0 0.0
    %281 = vmatpush1.xpose.msra.mxu0 0.0
    %282 = vmatprep.subr.mxu0 0.0
    %283 = vmatpush1.xpose.msra.mxu0 0.0
    %284 = vmatprep.subr.mxu0 0.0
    %285 = vmatpush1.xpose.msra.mxu0 0.0
    %286 = vmatprep.subr.mxu0 0.0
    %287 = vmatpush1.xpose.msra.mxu0 0.0
    %288 = vmatprep.subr.mxu0 0.0
    %289 = vmatpush1.xpose.msra.mxu0 0.0
    %290 = vmatprep.subr.mxu0 0.0
    %291 = vmatpush1.xpose.msra.mxu0 0.0
    %292 = vmatprep.subr.mxu0 0.0
    %293 = vmatpush1.xpose.msra.mxu0 0.0
    %294 = vmatprep.subr.mxu0 0.0
    %295 = vmatpush1.xpose.msra.mxu0 0.0
    %296 = vmatprep.subr.mxu0 0.0
    %297 = vmatpush1.xpose.msra.mxu0 0.0
    %298 = vmatprep.subr.mxu0 0.0
    %299 = vmatpush1.xpose.msra.mxu0 %v268
    %300 = vmatprep.subr.mxu0 0.0
    %301 = vmatpush1.xpose.msra.mxu0 %v265
    %302 = vmatprep.subr.mxu0 0.0
    %303 = vmatpush2.xpose.msra.mxu0 0.0
    %304 = vmatprep.subr.mxu0 0.0
    %305 = vmatpush2.xpose.msra.mxu0 0.0
    %306 = vmatprep.subr.mxu0 0.0
    %307 = vmatpush2.xpose.msra.mxu0 0.0
    %308 = vmatprep.subr.mxu0 0.0
    %309 = vmatpush2.xpose.msra.mxu0 0.0
    %310 = vmatprep.subr.mxu0 0.0
    %311 = vmatpush2.xpose.msra.mxu0 0.0
    %312 = vmatprep.subr.mxu0 0.0
    %313 = vmatpush2.xpose.msra.mxu0 0.0
    %314 = vmatprep.subr.mxu0 0.0
    %315 = vmatpush2.xpose.msra.mxu0 0.0
    %316 = vmatprep.subr.mxu0 0.0
    %317 = vmatpush2.xpose.msra.mxu0 0.0
    %318 = vmatprep.subr.mxu0 0.0
    %319 = vmatpush2.xpose.msra.mxu0 0.0
    %320 = vmatprep.subr.mxu0 0.0
    %321 = vmatpush2.xpose.msra.mxu0 0.0
    %322 = vmatprep.subr.mxu0 0.0
    %323 = vmatpush2.xpose.msra.mxu0 0.0
    %324 = vmatprep.subr.mxu0 0.0
    %325 = vmatpush2.xpose.msra.mxu0 0.0
    %326 = vmatprep.subr.mxu0 0.0
    %327 = vmatpush2.xpose.msra.mxu0 0.0
    %328 = vmatprep.subr.mxu0 0.0
    %329 = vmatpush2.xpose.msra.mxu0 0.0
    %330 = vmatprep.subr.mxu0 0.0
    %331 = vmatpush2.xpose.msra.mxu0 0.0
    %332 = vmatprep.subr.mxu0 0.0
    %333 = vmatpush2.xpose.msra.mxu0 0.0
    %334 = vmatprep.mubr.f32.mxu0 0.0
    %335 = vmatmul.mubr.f32.gmra.mxu0 %v259
    %v336 = vpop.f32.mrf.mxu0
    %v337 = vadd.f32 1e-08, %v336
    %v338 = vpop.f32.mrf.mxu0
    %339 = vmatprep.mubr.f32.mxu0 0.0
    %340 = vmatmul.mubr.f32.gmra.mxu0 %v262
    %v341 = vpop.f32.mrf.mxu0
    %v342 = vadd.f32 1e-08, %v341
    %v343 = vpop.f32.mrf.mxu0
    %344 = vdwg.mxu0
    %v345 = vsel %vm155, %v337, 0.0
    %346 = vadd.xlane.f32.xlu0 %v345
    %v347 = vpop.xlane.xlu0 %346
    %v348 = vsel %vm155, %v342, 0.0
    %349 = vadd.xlane.f32.xlu0 %v348
    %v350 = vpop.xlane.xlu0 %349
    %v351 = vlog2.pop %v347
    %v352 = vmul.f32 %v351, 0.6931472
    %v353 = vlog2.pop %v350
    %v354 = vmul.f32 %v353, 0.6931472
    %v355 = vlog2.pop %v337
    %v356 = vmul.f32 %v355, 0.6931472
    %v357 = vlog2.pop %v342
    %v358 = vmul.f32 %v357, 0.6931472
    %v359 = vsub.f32 %v352, %v356
    %v360 = vsub.f32 %v354, %v358
    %v361 = vmul.f32 %v256, %v359
    %v362 = vmul.f32 %v257, %v360
    %v363 = vsel %vm155, %v361, 0.0
    %364 = vadd.xlane.f32.xlu0 %v363
    %v365 = vpop.xlane.xlu0 %364
    %v366 = vsel %vm155, %v362, 0.0
    %367 = vadd.xlane.f32.xlu0 %v366
    %v368 = vpop.xlane.xlu0 %367
    %v369 = vadd.f32 %v365, %v368
    %v370 = vrot.slane %v369, 4
    %v371 = vadd.f32 %v369, %v370
    %v372 = vrot.slane %v371, 2
    %v373 = vadd.f32 %v371, %v372
    %v374 = vrot.slane %v373, 1
    %v375 = vadd.f32 %v373, %v374
    %v376 = vrcp.pop 16.0
    %v377 = vmul.f32 %v375, %v376
    %v378 = vsel %vm72, %v93, 0.0
    %v379 = vsel %vm72, %v94, 0.0
    %v380 = vadd.f32 %v378, %v379
    %v381 = vrot.slane %v380, 4
    %v382 = vadd.f32 %v380, %v381
    %v383 = vrot.slane %v382, 2
    %v384 = vadd.f32 %v382, %v383
    %v385 = vrot.slane %v384, 1
    %v386 = vadd.f32 %v384, %v385
    %v387 = vmul.f32 %v386, %v376
    %v388 = vadd.f32 %v387, 1e-08
    %v389 = vsel %vm72, %v388, 0.0
    %390 = vadd.xlane.f32.xlu0 %v389
    %v391 = vpop.xlane.xlu0 %390
    %v392 = vlog2.pop %v391
    %v393 = vmul.f32 %v392, 0.6931472
    %v394 = vlog2.pop %v388
    %v395 = vmul.f32 %v394, 0.6931472
    %v396 = vsel %vm72, %v395, 0.0
    %397 = vadd.xlane.f32.xlu0 %v396
    %v398 = vpop.xlane.xlu0 %397
    %v399 = vrcp.pop 8.0
    %v400 = vmul.f32 %v398, %v399
    %v401 = vsub.f32 %v393, %v400
    %v402 = vadd.f32 %v377, %v401
    %vm403 = vcmask 0
    %404 = vst.msk [vmem:[#allocation2] sm:$0x1] %vm403, %v402
    %v405 = vlaneseq
    %v406 = vshrl.u32 %v405, 7
    %v407 = vlaneseq
    %v408 = vand.u32 %v407, 127
    %vm409 = vcmp.eq.s32.totalorder %v406, %v408
    %v410 = vsel %vm409, 1, 0
    %v411 = vcvt.s32.f32 %v410
    %v412 = vmul.f32 %v226, %v411
    %v413 = vsel %vm72, %v412, 0.0
    %414 = vadd.xlane.f32.xlu0 %v413
    %v415 = vpop.xlane.xlu0 %414
    %v416 = vsel %vm72, %v226, 0.0
    %417 = vadd.xlane.f32.xlu0 %v416
    %v418 = vpop.xlane.xlu0 %417
    %v419 = vadd.f32 %v418, 8e-08
    %v420 = vlog2.pop %v419
    %v421 = vmul.f32 %v420, 0.6931472
    %v422 = vadd.f32 %v415, 1e-08
    %v423 = vlog2.pop %v422
    %v424 = vmul.f32 %v423, 0.6931472
    %v425 = vsub.f32 %v421, %v424
    %v426 = vrot.slane %v425, 4
    %v427 = vadd.f32 %v425, %v426
    %v428 = vrot.slane %v427, 2
    %v429 = vadd.f32 %v427, %v428
    %v430 = vrot.slane %v429, 1
    %v431 = vadd.f32 %v429, %v430
    %v432 = vmul.f32 %v431, %v399
    %v433 = vsel %vm72, %v121, 0.0
    %434 = vadd.xlane.f32.xlu0 %v433
    %v435 = vpop.xlane.xlu0 %434
    %v436 = vsel %vm72, %v122, 0.0
    %437 = vadd.xlane.f32.xlu0 %v436
    %v438 = vpop.xlane.xlu0 %437
    %v439 = vmul.f32 %v435, %v399
    %v440 = vmul.f32 %v438, %v399
    %v441 = vadd.f32 %v439, 1e-08
    %v442 = vadd.f32 %v440, 1e-08
    %v443 = vadd.f32 %v441, %v442
    %v444 = vrot.slane %v443, 4
    %v445 = vadd.f32 %v443, %v444
    %v446 = vrot.slane %v445, 2
    %v447 = vadd.f32 %v445, %v446
    %v448 = vrot.slane %v447, 1
    %v449 = vadd.f32 %v447, %v448
    %v450 = vlog2.pop %v449
    %v451 = vmul.f32 %v450, 0.6931472
    %v452 = vlog2.pop %v441
    %v453 = vmul.f32 %v452, 0.6931472
    %v454 = vlog2.pop %v442
    %v455 = vmul.f32 %v454, 0.6931472
    %v456 = vadd.f32 %v453, %v455
    %v457 = vrot.slane %v456, 4
    %v458 = vadd.f32 %v456, %v457
    %v459 = vrot.slane %v458, 2
    %v460 = vadd.f32 %v458, %v459
    %v461 = vrot.slane %v460, 1
    %v462 = vadd.f32 %v460, %v461
    %v463 = vmul.f32 %v462, %v376
    %v464 = vsub.f32 %v451, %v463
    %v465 = vadd.f32 %v432, %v464
    %466 = vst.msk [vmem:[#allocation4] sm:$0x1] %vm403, %v465
    // Predicated region
    $region18: #{lba_loss.1} parent=1 // pred_check
      _
    $region19: #{lba_loss.1} parent=1 // pred_check_branch
      %468 = sbr.rel (0) target = $region21
    $region20: #{lba_loss.1} parent=1 // pred_region
      %s470 = ssub.s32 16, 16
      %471 = vsyncadd [#allocation3], %s470
      %s473 = sshll.u32 [#allocation2], 4
      %s474 = int_to_ptr.vmem [resolvable:$true] %s473
      %476 = dma.vmem_to_hbm [thread:$0]  %s474, 16, %s4, [#allocation3]
    $region21: #{lba_loss.1} parent=1 // pred_fallthru
      _
    // Predicated region
    $region22: #{lba_loss.1} parent=1 // pred_check
      _
    $region23: #{lba_loss.1} parent=1 // pred_check_branch
      %478 = sbr.rel (0) target = $region25
    $region24: #{lba_loss.1} parent=1 // pred_region
      %s480 = ssub.s32 16, 16
      %481 = vsyncadd [#allocation5], %s480
      %s483 = sshll.u32 [#allocation4], 4
      %s484 = int_to_ptr.vmem [resolvable:$true] %s483
      %486 = dma.vmem_to_hbm [thread:$0]  %s484, 16, %s5, [#allocation5]
    $region25: #{lba_loss.1} parent=1 // pred_fallthru
      _
    // Predicated region
    $region26: #{lba_loss.1} parent=1 // pred_check
      _
    $region27: #{lba_loss.1} parent=1 // pred_check_branch
      %488 = sbr.rel (0) target = $region29
    $region28: #{lba_loss.1} parent=1 // pred_region
      %489 = dma.done [#allocation3], 16
    $region29: #{lba_loss.1} parent=1 // pred_fallthru
      _
    // Predicated region
    $region30: #{lba_loss.1} parent=1 // pred_check
      _
    $region31: #{lba_loss.1} parent=1 // pred_check_branch
      %491 = sbr.rel (0) target = $region33
    $region32: #{lba_loss.1} parent=1 // pred_region
      %492 = dma.done [#allocation5], 16
    $region33: #{lba_loss.1} parent=1 // pred_fallthru
      _
    %493 = vsyncpa [#allocation3], 1
    %494 = vsyncpa [#allocation5], 1

</llo_original>
